<compile_context>
chip_gen: v6e
topology: v6e:2x2x1
jax: 0.10.0
libtpu: 0.0.40
codegen_flags: <defaults>
</compile_context>

<pallas_src>
import jax
import jax.numpy as jnp
import numpy as np
from jax.experimental import pallas as pl
from jax.experimental.pallas import tpu as pltpu


def _round_up(n: int, m: int) -> int:
    return ((n + m - 1) // m) * m


def _double_input_kernel(w_ref, b_ref, xin_ref, out_ref):
    """Folded forward for one batch tile.

    w_ref   : SMEM (2, 3)  -- effective weight of the folded 6-layer affine chain
    b_ref   : SMEM (3,)    -- effective bias of the folded chain
    xin_ref : VMEM (4, TB) -- feature-major inputs: rows 0-1 = x, rows 2-3 = y
    out_ref : VMEM (6, TB) -- feature-major outputs: rows 0-2 = mlp(x), rows 3-5 = mlp(y)
    """
    v = xin_ref[...]                 # single lane-dense load of the whole block
    x0 = v[0:1, :]
    x1 = v[1:2, :]
    y0 = v[2:3, :]
    y1 = v[3:4, :]

    for j in range(3):               # static unroll over the 3 output features
        w0j = w_ref[0, j]
        w1j = w_ref[1, j]
        bj = b_ref[j]
        out_ref[j:j + 1, :] = w0j * x0 + w1j * x1 + bj       # mlp(x) row j
        out_ref[j + 3:j + 4, :] = w0j * y0 + w1j * y1 + bj   # mlp(y) row j


def double_input_forward(x, y, w1, ws, bs, *, max_block_b=128 * 1024):
    """Equivalent of _DoubleInput.forward: cat(mlp(x), mlp(y), dim=1) -> (B, 6)."""
    B = x.shape[0]

    # Fold the purely-affine 6-layer chain into one affine map (tiny, plain JAX).
    w_eff = w1                       # (2, 3)
    b_eff = bs[0]                    # (3,)
    for i in range(ws.shape[0]):
        w_eff = w_eff @ ws[i]
        b_eff = b_eff @ ws[i] + bs[i + 1]
    w_eff = w_eff.astype(jnp.float32)
    b_eff = b_eff.astype(jnp.float32)

    # Feature-major packed input (4, B): batch on the lane axis.
    # TODO(synk): if the caller can provide feature-major I/O, drop these wrapper
    # transposes — they cost as much HBM traffic as the (HBM-bound) kernel itself.
    xin = jnp.concatenate([x.T, y.T], axis=0).astype(jnp.float32)

    # Tile sizing: pad batch only to a multiple of 128 lanes; tile is the largest
    # of (whole padded batch / ~4 tiles) capped at max_block_b, always a multiple
    # of 128. Small B -> single 128-lane tile; huge B -> 128K-lane tiles.
    bp128 = _round_up(max(B, 1), 128)
    block_b = min(max_block_b, _round_up(pl.cdiv(bp128, 4), 128))
    block_b = max(block_b, 128)
    grid_n = pl.cdiv(bp128, block_b)
    bp = grid_n * block_b
    if bp != B:
        xin = jnp.pad(xin, ((0, 0), (0, bp - B)))

    cost = pl.CostEstimate(
        flops=24 * bp,                       # 6 rows * (2 mul + 2 add) per lane
        transcendentals=0,
        bytes_accessed=(4 + 6) * bp * 4,     # f32 in (4,bp) + out (6,bp)
    )

    out = pl.pallas_call(
        _double_input_kernel,
        out_shape=jax.ShapeDtypeStruct((6, bp), jnp.float32),
        grid=(grid_n,),
        in_specs=[
            pl.BlockSpec(memory_space=pltpu.MemorySpace.SMEM),   # folded weight (2,3)
            pl.BlockSpec(memory_space=pltpu.MemorySpace.SMEM),   # folded bias (3,)
            pl.BlockSpec((4, block_b), lambda i: (0, i)),        # packed x|y features
        ],
        out_specs=pl.BlockSpec((6, block_b), lambda i: (0, i)),
        compiler_params=pltpu.CompilerParams(
            dimension_semantics=("parallel",),   # batch tiles shard across TCs (v7x)
            vmem_limit_bytes=40 << 20,           # 128K-lane tile ~16 MiB dbl-buffered;
                                                 # > v5e's 16 MiB default scoped limit
        ),
        cost_estimate=cost,
    )(w_eff, b_eff, xin)

    # Back to row-major (B, 6): cols 0-2 = mlp(x), cols 3-5 = mlp(y).
    return out[:, :B].T


def init_params(key):
    """Deterministic init mimicking torch.nn.Linear (uniform +-1/sqrt(fan_in)).

    Weights are stored pre-transposed as [in, out] so forward is y = x @ W + b.
    """
    keys = jax.random.split(key, 12)
    bound0 = 1.0 / np.sqrt(2.0)
    w1 = jax.random.uniform(keys[0], (2, 3), jnp.float32, -bound0, bound0)
    b_list = [jax.random.uniform(keys[1], (3,), jnp.float32, -bound0, bound0)]
    bound = 1.0 / np.sqrt(3.0)
    w_list = []
    for i in range(5):
        w_list.append(jax.random.uniform(keys[2 + 2 * i], (3, 3), jnp.float32, -bound, bound))
        b_list.append(jax.random.uniform(keys[3 + 2 * i], (3,), jnp.float32, -bound, bound))
    ws = jnp.stack(w_list, axis=0)   # (5, 3, 3)
    bs = jnp.stack(b_list, axis=0)   # (6, 3)
    return w1, ws, bs


def reference_forward(x, y, w1, ws, bs):
    def mlp(v):
        h = v @ w1 + bs[0]
        for i in range(5):
            h = h @ ws[i] + bs[i + 1]
        return h
    return jnp.concatenate([mlp(x), mlp(y)], axis=1)


if __name__ == "__main__":
    key = jax.random.PRNGKey(0)
    kx, ky, kp = jax.random.split(key, 3)

    B = 8
    x = jax.random.normal(kx, (B, 2), jnp.float32)
    y = jax.random.normal(ky, (B, 2), jnp.float32)
    w1, ws, bs = init_params(kp)

    out = double_input_forward(x, y, w1, ws, bs)
    out = jax.block_until_ready(out)

    ref = reference_forward(x, y, w1, ws, bs)
    assert out.shape == (B, 6), out.shape
    np.testing.assert_allclose(np.asarray(out), np.asarray(ref), rtol=1e-5, atol=1e-5)

    print("KERNEL_OK")
</pallas_src>

<mosaic_0001>
module attributes {stable_mosaic.version = 11 : i64} {
  func.func @_double_input_kernel(%arg0: i32, %arg1: memref<2x3xf32, #tpu.memory_space<smem>>, %arg2: memref<3xf32, #tpu.memory_space<smem>>, %arg3: memref<4x128xf32, #tpu.memory_space<vmem>>, %arg4: memref<6x128xf32, #tpu.memory_space<vmem>>) attributes {dimension_semantics = [#tpu.dimension_semantics<parallel>], iteration_bounds = array<i64: 1>, scalar_prefetch = 0 : i64, scratch_operands = 0 : i64, tpu.core_type = #tpu.core_type<tc>, window_params = [{transform_indices = @transform_0, window_bounds = array<i64: 2, 3>}, {transform_indices = @transform_1, window_bounds = array<i64: 3>}, {transform_indices = @transform_2, window_bounds = array<i64: 4, 128>}, {transform_indices = @transform_3, window_bounds = array<i64: 6, 128>}]} {
    %c0 = arith.constant 0 : index
    %c0_0 = arith.constant 0 : index
    %0 = vector.load %arg3[%c0, %c0_0] : memref<4x128xf32, #tpu.memory_space<vmem>>, vector<4x128xf32>
    %1 = vector.extract_strided_slice %0 {offsets = [0, 0], sizes = [1, 128], strides = [1, 1]} : vector<4x128xf32> to vector<1x128xf32>
    %2 = vector.extract_strided_slice %0 {offsets = [1, 0], sizes = [1, 128], strides = [1, 1]} : vector<4x128xf32> to vector<1x128xf32>
    %3 = vector.extract_strided_slice %0 {offsets = [2, 0], sizes = [1, 128], strides = [1, 1]} : vector<4x128xf32> to vector<1x128xf32>
    %4 = vector.extract_strided_slice %0 {offsets = [3, 0], sizes = [1, 128], strides = [1, 1]} : vector<4x128xf32> to vector<1x128xf32>
    %c0_1 = arith.constant 0 : index
    %c0_2 = arith.constant 0 : index
    %5 = memref.load %arg1[%c0_1, %c0_2] : memref<2x3xf32, #tpu.memory_space<smem>>
    %c1 = arith.constant 1 : index
    %c0_3 = arith.constant 0 : index
    %6 = memref.load %arg1[%c1, %c0_3] : memref<2x3xf32, #tpu.memory_space<smem>>
    %c0_4 = arith.constant 0 : index
    %7 = memref.load %arg2[%c0_4] : memref<3xf32, #tpu.memory_space<smem>>
    %8 = vector.broadcast %5 : f32 to vector<1x128xf32>
    %9 = arith.mulf %8, %1 : vector<1x128xf32>
    %10 = vector.broadcast %6 : f32 to vector<1x128xf32>
    %11 = arith.mulf %10, %2 : vector<1x128xf32>
    %12 = arith.addf %9, %11 : vector<1x128xf32>
    %13 = vector.broadcast %7 : f32 to vector<1x128xf32>
    %14 = arith.addf %12, %13 : vector<1x128xf32>
    %c0_5 = arith.constant 0 : index
    %c0_6 = arith.constant 0 : index
    %15 = vector.load %arg4[%c0_5, %c0_6] : memref<6x128xf32, #tpu.memory_space<vmem>>, vector<1x128xf32>
    tpu.vector_store %arg4[%c0_5, %c0_6], %14 {strides = array<i32>} : memref<6x128xf32, #tpu.memory_space<vmem>>, vector<1x128xf32>,
    %16 = vector.broadcast %5 : f32 to vector<1x128xf32>
    %17 = arith.mulf %16, %3 : vector<1x128xf32>
    %18 = vector.broadcast %6 : f32 to vector<1x128xf32>
    %19 = arith.mulf %18, %4 : vector<1x128xf32>
    %20 = arith.addf %17, %19 : vector<1x128xf32>
    %21 = vector.broadcast %7 : f32 to vector<1x128xf32>
    %22 = arith.addf %20, %21 : vector<1x128xf32>
    %c3 = arith.constant 3 : index
    %c0_7 = arith.constant 0 : index
    %23 = vector.load %arg4[%c3, %c0_7] : memref<6x128xf32, #tpu.memory_space<vmem>>, vector<1x128xf32>
    tpu.vector_store %arg4[%c3, %c0_7], %22 {strides = array<i32>} : memref<6x128xf32, #tpu.memory_space<vmem>>, vector<1x128xf32>,
    %c0_8 = arith.constant 0 : index
    %c1_9 = arith.constant 1 : index
    %24 = memref.load %arg1[%c0_8, %c1_9] : memref<2x3xf32, #tpu.memory_space<smem>>
    %c1_10 = arith.constant 1 : index
    %c1_11 = arith.constant 1 : index
    %25 = memref.load %arg1[%c1_10, %c1_11] : memref<2x3xf32, #tpu.memory_space<smem>>
    %c1_12 = arith.constant 1 : index
    %26 = memref.load %arg2[%c1_12] : memref<3xf32, #tpu.memory_space<smem>>
    %27 = vector.broadcast %24 : f32 to vector<1x128xf32>
    %28 = arith.mulf %27, %1 : vector<1x128xf32>
    %29 = vector.broadcast %25 : f32 to vector<1x128xf32>
    %30 = arith.mulf %29, %2 : vector<1x128xf32>
    %31 = arith.addf %28, %30 : vector<1x128xf32>
    %32 = vector.broadcast %26 : f32 to vector<1x128xf32>
    %33 = arith.addf %31, %32 : vector<1x128xf32>
    %c1_13 = arith.constant 1 : index
    %c0_14 = arith.constant 0 : index
    %34 = vector.load %arg4[%c1_13, %c0_14] : memref<6x128xf32, #tpu.memory_space<vmem>>, vector<1x128xf32>
    tpu.vector_store %arg4[%c1_13, %c0_14], %33 {strides = array<i32>} : memref<6x128xf32, #tpu.memory_space<vmem>>, vector<1x128xf32>,
    %35 = vector.broadcast %24 : f32 to vector<1x128xf32>
    %36 = arith.mulf %35, %3 : vector<1x128xf32>
    %37 = vector.broadcast %25 : f32 to vector<1x128xf32>
    %38 = arith.mulf %37, %4 : vector<1x128xf32>
    %39 = arith.addf %36, %38 : vector<1x128xf32>
    %40 = vector.broadcast %26 : f32 to vector<1x128xf32>
    %41 = arith.addf %39, %40 : vector<1x128xf32>
    %c4 = arith.constant 4 : index
    %c0_15 = arith.constant 0 : index
    %42 = vector.load %arg4[%c4, %c0_15] : memref<6x128xf32, #tpu.memory_space<vmem>>, vector<1x128xf32>
    tpu.vector_store %arg4[%c4, %c0_15], %41 {strides = array<i32>} : memref<6x128xf32, #tpu.memory_space<vmem>>, vector<1x128xf32>,
    %c0_16 = arith.constant 0 : index
    %c2 = arith.constant 2 : index
    %43 = memref.load %arg1[%c0_16, %c2] : memref<2x3xf32, #tpu.memory_space<smem>>
    %c1_17 = arith.constant 1 : index
    %c2_18 = arith.constant 2 : index
    %44 = memref.load %arg1[%c1_17, %c2_18] : memref<2x3xf32, #tpu.memory_space<smem>>
    %c2_19 = arith.constant 2 : index
    %45 = memref.load %arg2[%c2_19] : memref<3xf32, #tpu.memory_space<smem>>
    %46 = vector.broadcast %43 : f32 to vector<1x128xf32>
    %47 = arith.mulf %46, %1 : vector<1x128xf32>
    %48 = vector.broadcast %44 : f32 to vector<1x128xf32>
    %49 = arith.mulf %48, %2 : vector<1x128xf32>
    %50 = arith.addf %47, %49 : vector<1x128xf32>
    %51 = vector.broadcast %45 : f32 to vector<1x128xf32>
    %52 = arith.addf %50, %51 : vector<1x128xf32>
    %c2_20 = arith.constant 2 : index
    %c0_21 = arith.constant 0 : index
    %53 = vector.load %arg4[%c2_20, %c0_21] : memref<6x128xf32, #tpu.memory_space<vmem>>, vector<1x128xf32>
    tpu.vector_store %arg4[%c2_20, %c0_21], %52 {strides = array<i32>} : memref<6x128xf32, #tpu.memory_space<vmem>>, vector<1x128xf32>,
    %54 = vector.broadcast %43 : f32 to vector<1x128xf32>
    %55 = arith.mulf %54, %3 : vector<1x128xf32>
    %56 = vector.broadcast %44 : f32 to vector<1x128xf32>
    %57 = arith.mulf %56, %4 : vector<1x128xf32>
    %58 = arith.addf %55, %57 : vector<1x128xf32>
    %59 = vector.broadcast %45 : f32 to vector<1x128xf32>
    %60 = arith.addf %58, %59 : vector<1x128xf32>
    %c5 = arith.constant 5 : index
    %c0_22 = arith.constant 0 : index
    %61 = vector.load %arg4[%c5, %c0_22] : memref<6x128xf32, #tpu.memory_space<vmem>>, vector<1x128xf32>
    tpu.vector_store %arg4[%c5, %c0_22], %60 {strides = array<i32>} : memref<6x128xf32, #tpu.memory_space<vmem>>, vector<1x128xf32>,
    return
  }
  func.func @transform_0(%arg0: i32) -> (i32, i32) {
    %c0_i32 = arith.constant 0 : i32
    %c0_i32_0 = arith.constant 0 : i32
    %c0_i32_1 = arith.constant 0 : i32
    return %c0_i32, %c0_i32_0 : i32, i32
  }
  func.func @transform_1(%arg0: i32) -> i32 {
    %c0_i32 = arith.constant 0 : i32
    %c0_i32_0 = arith.constant 0 : i32
    return %c0_i32 : i32
  }
  func.func @transform_2(%arg0: i32) -> (i32, i32) {
    %c0_i32 = arith.constant 0 : i32
    %c0_i32_0 = arith.constant 0 : i32
    return %c0_i32, %arg0 : i32, i32
  }
  func.func @transform_3(%arg0: i32) -> (i32, i32) {
    %c0_i32 = arith.constant 0 : i32
    %c0_i32_0 = arith.constant 0 : i32
    return %c0_i32, %arg0 : i32, i32
  }
}

</mosaic_0001>

<llo_original>
// kernel: tpu_custom_call.1
$region0: #{tpu_custom_call.1}
  #allocation0 [shape = 'u32[]', space=smem, size = 0x4, offset = 0x4, fixed_abs, tag = 'smem constant byte address 0x4 - core index']
  #allocation1 [shape = 'u32[144,128]{1,0:T(1,128)}', space=vmem, size = 0x12000, scoped, tag = 'internal scratch']
  %s0 = inlined_call_operand.hbm [shape: f32[2,3], index: 0, kind: input, shape index: {}]
  %s1 = inlined_call_operand.vmem [shape: f32[3], index: 1, kind: input, shape index: {}]
  %s2 = inlined_call_operand.hbm [shape: f32[4,128], index: 2, kind: input, shape index: {}]
  %s3 = inlined_call_operand.hbm [shape: f32[6,128], index: 3, kind: output, shape index: {}]
  %s4 = sld [smem:[#allocation0]]
  $region34: #{tpu_custom_call.1} parent=0
    _
  %s6 = ssub.s32 1, %s4
  %s7 = scalar_select 0, %s6, %s4
  $region1: #{tpu_custom_call.1} parent=0
    #allocation2 [shape = 'u8[1024]{0}', space=smem, size = 0x400, scoped, tag = 'input window, operand 0, single buffered']
    #allocation3 [shape = 's32[1]{0}', space=sflag, size = 0x4, scoped, tag = 'scoped memory for tpu_custom_call.1']
    #allocation4 [shape = 's32[1]{0}', space=sflag, size = 0x4, scoped, tag = 'scoped memory for tpu_custom_call.1']
    #allocation5 [shape = 's32[1]{0}', space=sflag, size = 0x4, scoped, tag = 'scoped memory for tpu_custom_call.1']
    #allocation6 [shape = 's32[1]{0}', space=sflag, size = 0x4, scoped, tag = 'scoped memory for tpu_custom_call.1']
    #allocation7 [shape = 'u8[512]{0}', space=smem, size = 0x200, scoped, tag = 'input window, operand 1, single buffered']
    #allocation8 [shape = 'u8[2048]{0}', space=vmem, size = 0x800, scoped, tag = 'input window, operand 2, single buffered']
    #allocation9 [shape = 'u8[4096]{0}', space=vmem, size = 0x1000, scoped, tag = 'output window, operand 0, single buffered']
    %8 = vsyncpa [#allocation5], 0
    %9 = vsyncpa [#allocation6], 0
    %10 = vsyncpa [#allocation3], 0
    %11 = vsyncpa [#allocation4], 0
    // Predicated region
    $region2: #{tpu_custom_call.1} parent=1 // pred_check
      _
    $region3: #{tpu_custom_call.1} parent=1 // pred_check_branch
      %13 = sbr.rel (0) target = $region5
    $region4: #{tpu_custom_call.1} parent=1 // pred_region
      %s15 = ssub.s32 32, 32
      %16 = vsyncadd [#allocation5], %s15
      %19 = dma.hbm_to_smem %s0, 32, [#allocation2], [#allocation5]
    $region5: #{tpu_custom_call.1} parent=1 // pred_fallthru
      _
    // Predicated region
    $region6: #{tpu_custom_call.1} parent=1 // pred_check
      _
    $region7: #{tpu_custom_call.1} parent=1 // pred_check_branch
      %21 = sbr.rel (0) target = $region9
    $region8: #{tpu_custom_call.1} parent=1 // pred_region
      %s23 = ssub.s32 16, 16
      %24 = vsyncadd [#allocation6], %s23
      %s26 = sshll.u32 %s1, 4
      %s27 = int_to_ptr.vmem [resolvable:$true] %s26
      %29 = dma.vmem_to_smem %s27, 16, [#allocation7], [#allocation6]
    $region9: #{tpu_custom_call.1} parent=1 // pred_fallthru
      _
    // Predicated region
    $region10: #{tpu_custom_call.1} parent=1 // pred_check
      _
    $region11: #{tpu_custom_call.1} parent=1 // pred_check_branch
      %31 = sbr.rel (0) target = $region13
    $region12: #{tpu_custom_call.1} parent=1 // pred_region
      %s33 = ssub.s32 64, 64
      %34 = vsyncadd [#allocation3], %s33
      %s36 = sshll.u32 [#allocation8], 4
      %s37 = int_to_ptr.vmem [resolvable:$true] %s36
      %39 = dma.hbm_to_vmem [thread:$0]  %s2, 64, %s37, [#allocation3]
    $region13: #{tpu_custom_call.1} parent=1 // pred_fallthru
      _
    // Predicated region
    $region14: #{tpu_custom_call.1} parent=1 // pred_check
      _
    $region15: #{tpu_custom_call.1} parent=1 // pred_check_branch
      %41 = sbr.rel (0) target = $region17
    $region16: #{tpu_custom_call.1} parent=1 // pred_region
      %42 = dma.done [#allocation5], 32
    $region17: #{tpu_custom_call.1} parent=1 // pred_fallthru
      _
    // Predicated region
    $region18: #{tpu_custom_call.1} parent=1 // pred_check
      _
    $region19: #{tpu_custom_call.1} parent=1 // pred_check_branch
      %44 = sbr.rel (0) target = $region21
    $region20: #{tpu_custom_call.1} parent=1 // pred_region
      %45 = dma.done [#allocation6], 16
    $region21: #{tpu_custom_call.1} parent=1 // pred_fallthru
      _
    // Predicated region
    $region22: #{tpu_custom_call.1} parent=1 // pred_check
      _
    $region23: #{tpu_custom_call.1} parent=1 // pred_check_branch
      %47 = sbr.rel (0) target = $region25
    $region24: #{tpu_custom_call.1} parent=1 // pred_region
      %48 = dma.done [#allocation3], 64
    $region25: #{tpu_custom_call.1} parent=1 // pred_fallthru
      _
    %49 = sfence
    %v50 = vld [vmem:[#allocation8] sm:$0xf]
    %s51 = sld [smem:[#allocation2]]
    %s52 = sld [smem:[#allocation2 + $0x80]]
    %s53 = sld [smem:[#allocation7]]
    %v54 = vstv %s51
    %v55 = vmul.f32 %v54, %v50
    %v56 = vstv %s52
    %v57 = vmul.f32 %v56, %v50
    %v59 = vrot.slane %v57, 1
    %v61 = vadd.f32 %v55, %v59
    %v62 = vstv %s53
    %v63 = vadd.f32 %v61, %v62
    %64 = vst [vmem:[#allocation9] sm:$0x1] %v63
    %65 = vst [vmem:[#allocation9 + $0x1] sm:$0x4] %v63
    %s66 = sld [smem:[#allocation2 + $0x1]]
    %s67 = sld [smem:[#allocation2 + $0x81]]
    %s68 = sld [smem:[#allocation7 + $0x1]]
    %v69 = vstv %s66
    %v70 = vmul.f32 %v69, %v50
    %v71 = vstv %s67
    %v72 = vmul.f32 %v71, %v50
    %v74 = vrot.slane %v72, 1
    %v76 = vadd.f32 %v70, %v74
    %v77 = vstv %s68
    %v78 = vadd.f32 %v76, %v77
    %79 = vst [vmem:[#allocation9 + $0x1] sm:$0x1] %v78
    %80 = vst [vmem:[#allocation9 + $0x2] sm:$0x4] %v78
    %s81 = sld [smem:[#allocation2 + $0x2]]
    %s82 = sld [smem:[#allocation2 + $0x82]]
    %s83 = sld [smem:[#allocation7 + $0x2]]
    %v84 = vstv %s81
    %v85 = vmul.f32 %v84, %v50
    %v86 = vstv %s82
    %v87 = vmul.f32 %v86, %v50
    %v89 = vrot.slane %v87, 1
    %v91 = vadd.f32 %v85, %v89
    %v92 = vstv %s83
    %v93 = vadd.f32 %v91, %v92
    %94 = vst [vmem:[#allocation9 + $0x2] sm:$0x1] %v93
    %95 = vst [vmem:[#allocation9 + $0x3] sm:$0x4] %v93
    // Predicated region
    $region26: #{tpu_custom_call.1} parent=1 // pred_check
      _
    $region27: #{tpu_custom_call.1} parent=1 // pred_check_branch
      %97 = sbr.rel (0) target = $region29
    $region28: #{tpu_custom_call.1} parent=1 // pred_region
      %s99 = ssub.s32 128, 128
      %100 = vsyncadd [#allocation4], %s99
      %s102 = sshll.u32 [#allocation9], 4
      %s103 = int_to_ptr.vmem [resolvable:$true] %s102
      %105 = dma.vmem_to_hbm [thread:$0]  %s103, 128, %s3, [#allocation4]
    $region29: #{tpu_custom_call.1} parent=1 // pred_fallthru
      _
    // Predicated region
    $region30: #{tpu_custom_call.1} parent=1 // pred_check
      _
    $region31: #{tpu_custom_call.1} parent=1 // pred_check_branch
      %107 = sbr.rel (0) target = $region33
    $region32: #{tpu_custom_call.1} parent=1 // pred_region
      %108 = dma.done [#allocation4], 128
    $region33: #{tpu_custom_call.1} parent=1 // pred_fallthru
      _
    %109 = vsyncpa [#allocation3], 1
    %110 = vsyncpa [#allocation4], 1
    %111 = vsyncpa [#allocation5], 1
    %112 = vsyncpa [#allocation6], 1

</llo_original>
